<compile_context>
chip_gen: v7x
topology: tpu7x:2x2x1
jax: 0.10.0
libtpu: 0.0.40
codegen_flags: <defaults>
</compile_context>

<pallas_src>
import jax
import jax.numpy as jnp
from jax.experimental import pallas as pl
from jax.experimental.pallas import tpu as pltpu


P = 32  # samples packed per row -> output row is exactly 128 lanes (32 * 4)


def mlp_packed_kernel(x_ref, w1_ref, b1_ref, w2_ref, b2_ref, o_ref):
    # fc1 (block-diagonal, lane-dense) + relu
    h = jnp.dot(x_ref[...], w1_ref[...], preferred_element_type=jnp.float32)
    h = jnp.maximum(h + b1_ref[...], 0.0)          # (tile_r, 256) + (1, 256)
    # fc2
    y = jnp.dot(h, w2_ref[...], preferred_element_type=jnp.float32)
    o_ref[...] = (y + b2_ref[...]).astype(o_ref.dtype)   # (tile_r, 128) full-width store


def net_forward(x, w1, b1, w2, b2, *, max_tile_rows=2048):
    """x: any shape with total elements divisible by 12 (mirrors view(-1, 12)).

    max_tile_rows = packed rows per grid step (32 samples each); sweep 512-4096.
    """
    x2 = x.reshape(-1, 12).astype(jnp.float32)
    n = x2.shape[0]

    # ---- tile sizing over packed rows (each packed row = P samples) ----
    r = -(-n // P)                                   # packed rows needed
    tile_r = -(-min(max_tile_rows, r) // 8) * 8      # sublane-aligned tile
    num_tiles = -(-r // tile_r)
    n_pad = num_tiles * tile_r * P
    if n_pad != n:
        x2 = jnp.pad(x2, ((0, n_pad - n), (0, 0)))   # tail rows are zeros, sliced off below
    xp = x2.reshape(num_tiles * tile_r, 12 * P)      # bit-identical reshape (free)

    # ---- block-diagonal weights: one matmul applies the Linear to each packed sample ----
    eye = jnp.eye(P, dtype=jnp.float32)
    w1p = jnp.kron(eye, w1)                          # (384, 256)
    w2p = jnp.kron(eye, w2)                          # (256, 128)
    b1p = jnp.tile(b1.reshape(1, 8), (1, P))         # (1, 256)
    b2p = jnp.tile(b2.reshape(1, 4), (1, P))         # (1, 128)

    yp = pl.pallas_call(
        mlp_packed_kernel,
        out_shape=jax.ShapeDtypeStruct((num_tiles * tile_r, 4 * P), jnp.float32),
        grid=(num_tiles,),
        in_specs=[
            pl.BlockSpec((tile_r, 12 * P), lambda i: (i, 0)),   # x: pipelined over batch
            pl.BlockSpec((12 * P, 8 * P), lambda i: (0, 0)),    # w1p: resident
            pl.BlockSpec((1, 8 * P), lambda i: (0, 0)),         # b1p: resident
            pl.BlockSpec((8 * P, 4 * P), lambda i: (0, 0)),     # w2p: resident
            pl.BlockSpec((1, 4 * P), lambda i: (0, 0)),         # b2p: resident
        ],
        out_specs=pl.BlockSpec((tile_r, 4 * P), lambda i: (i, 0)),
        compiler_params=pltpu.CompilerParams(
            dimension_semantics=("parallel",),        # shard batch grid across v7x's 2 TCs
            vmem_limit_bytes=48 * 1024 * 1024,        # fits v5e/v6e/v7x budgets
        ),
    )(xp, w1p, b1p, w2p, b2p)

    # NOTE: for tiny batches (N < ~1024) a plain jnp expression is faster than any
    # pallas_call launch; a dispatch threshold could be added here if desired.
    return yp.reshape(n_pad, 4)[:n]                  # bit-identical reshape + tail slice


def init_params(key):
    """Deterministic init matching nn.Linear shapes (uniform +-1/sqrt(fan_in))."""
    k1, k2, k3, k4 = jax.random.split(key, 4)
    bound1 = 1.0 / jnp.sqrt(12.0)
    bound2 = 1.0 / jnp.sqrt(8.0)
    # stored as (in, out) == transpose of PyTorch's (out, in) weight
    w1 = jax.random.uniform(k1, (12, 8), jnp.float32, -bound1, bound1)
    b1 = jax.random.uniform(k2, (1, 8), jnp.float32, -bound1, bound1)
    w2 = jax.random.uniform(k3, (8, 4), jnp.float32, -bound2, bound2)
    b2 = jax.random.uniform(k4, (1, 4), jnp.float32, -bound2, bound2)
    return w1, b1, w2, b2


def _reference(x, w1, b1, w2, b2):
    x2 = x.reshape(-1, 12).astype(jnp.float32)
    return jnp.maximum(x2 @ w1 + b1, 0.0) @ w2 + b2


if __name__ == "__main__":
    key = jax.random.PRNGKey(0)
    kx, kb, kp = jax.random.split(key, 3)
    w1, b1, w2, b2 = init_params(kp)

    # small demo input, mirrors view(-1, 12): 2*4*3 = 24 elements -> (2, 12)
    x = jax.random.normal(kx, (2, 4, 3), jnp.float32)
    out = jax.block_until_ready(net_forward(x, w1, b1, w2, b2))
    assert out.shape == (2, 4)
    assert jnp.allclose(out, _reference(x, w1, b1, w2, b2), atol=1e-4, rtol=1e-4)

    # second check: batch not divisible by pack/tile size, multi-step grid (4 tiles)
    xb = jax.random.normal(kb, (1000, 12), jnp.float32)
    outb = jax.block_until_ready(net_forward(xb, w1, b1, w2, b2, max_tile_rows=8))
    assert outb.shape == (1000, 4)
    assert jnp.allclose(outb, _reference(xb, w1, b1, w2, b2), atol=1e-4, rtol=1e-4)

    print("KERNEL_OK")
</pallas_src>

<mosaic_0001>
module attributes {stable_mosaic.version = 11 : i64} {
  func.func @mlp_packed_kernel(%arg0: i32, %arg1: memref<8x384xf32, #tpu.memory_space<vmem>>, %arg2: memref<384x256xf32, #tpu.memory_space<vmem>>, %arg3: memref<1x256xf32, #tpu.memory_space<vmem>>, %arg4: memref<256x128xf32, #tpu.memory_space<vmem>>, %arg5: memref<1x128xf32, #tpu.memory_space<vmem>>, %arg6: memref<8x128xf32, #tpu.memory_space<vmem>>) attributes {dimension_semantics = [#tpu.dimension_semantics<parallel>], iteration_bounds = array<i64: 1>, scalar_prefetch = 0 : i64, scratch_operands = 0 : i64, tpu.core_type = #tpu.core_type<tc>, window_params = [{transform_indices = @transform_0, window_bounds = array<i64: 8, 384>}, {pipeline_mode = #tpu.pipeline_mode<synchronous>, transform_indices = @transform_1, window_bounds = array<i64: 384, 256>}, {pipeline_mode = #tpu.pipeline_mode<synchronous>, transform_indices = @transform_2, window_bounds = array<i64: 1, 256>}, {pipeline_mode = #tpu.pipeline_mode<synchronous>, transform_indices = @transform_3, window_bounds = array<i64: 256, 128>}, {pipeline_mode = #tpu.pipeline_mode<synchronous>, transform_indices = @transform_4, window_bounds = array<i64: 1, 128>}, {transform_indices = @transform_5, window_bounds = array<i64: 8, 128>}]} {
    %c0 = arith.constant 0 : index
    %c0_0 = arith.constant 0 : index
    %0 = vector.load %arg1[%c0, %c0_0] : memref<8x384xf32, #tpu.memory_space<vmem>>, vector<8x384xf32>
    %c0_1 = arith.constant 0 : index
    %c0_2 = arith.constant 0 : index
    %1 = vector.load %arg2[%c0_1, %c0_2] : memref<384x256xf32, #tpu.memory_space<vmem>>, vector<384x256xf32>
    %cst = arith.constant dense<0.000000e+00> : vector<8x256xf32>
    %2 = tpu.matmul %0, %1, %cst {dimension_numbers = #tpu.dot_dimension_numbers<[1], [0], [0], [1], [0, 0, 1, 1], [], []>} : vector<8x384xf32>, vector<384x256xf32>, vector<8x256xf32> -> vector<8x256xf32>
    %c0_3 = arith.constant 0 : index
    %c0_4 = arith.constant 0 : index
    %3 = vector.load %arg3[%c0_3, %c0_4] : memref<1x256xf32, #tpu.memory_space<vmem>>, vector<1x256xf32>
    %4 = vector.broadcast %3 : vector<1x256xf32> to vector<8x256xf32>
    %5 = arith.addf %2, %4 : vector<8x256xf32>
    %cst_5 = arith.constant 0.000000e+00 : f32
    %6 = vector.broadcast %cst_5 : f32 to vector<8x256xf32>
    %7 = arith.maximumf %5, %6 : vector<8x256xf32>
    %c0_6 = arith.constant 0 : index
    %c0_7 = arith.constant 0 : index
    %8 = vector.load %arg4[%c0_6, %c0_7] : memref<256x128xf32, #tpu.memory_space<vmem>>, vector<256x128xf32>
    %cst_8 = arith.constant dense<0.000000e+00> : vector<8x128xf32>
    %9 = tpu.matmul %7, %8, %cst_8 {dimension_numbers = #tpu.dot_dimension_numbers<[1], [0], [0], [1], [0, 0, 1, 1], [], []>} : vector<8x256xf32>, vector<256x128xf32>, vector<8x128xf32> -> vector<8x128xf32>
    %c0_9 = arith.constant 0 : index
    %c0_10 = arith.constant 0 : index
    %10 = vector.load %arg5[%c0_9, %c0_10] : memref<1x128xf32, #tpu.memory_space<vmem>>, vector<1x128xf32>
    %11 = vector.broadcast %10 : vector<1x128xf32> to vector<8x128xf32>
    %12 = arith.addf %9, %11 : vector<8x128xf32>
    %c0_11 = arith.constant 0 : index
    %c0_12 = arith.constant 0 : index
    %13 = vector.load %arg6[%c0_11, %c0_12] : memref<8x128xf32, #tpu.memory_space<vmem>>, vector<8x128xf32>
    tpu.vector_store %arg6[%c0_11, %c0_12], %12 {strides = array<i32>} : memref<8x128xf32, #tpu.memory_space<vmem>>, vector<8x128xf32>,
    return
  }
  func.func @transform_0(%arg0: i32) -> (i32, i32) {
    %c0_i32 = arith.constant 0 : i32
    %c0_i32_0 = arith.constant 0 : i32
    return %arg0, %c0_i32 : i32, i32
  }
  func.func @transform_1(%arg0: i32) -> (i32, i32) {
    %c0_i32 = arith.constant 0 : i32
    %c0_i32_0 = arith.constant 0 : i32
    %c0_i32_1 = arith.constant 0 : i32
    return %c0_i32, %c0_i32_0 : i32, i32
  }
  func.func @transform_2(%arg0: i32) -> (i32, i32) {
    %c0_i32 = arith.constant 0 : i32
    %c0_i32_0 = arith.constant 0 : i32
    %c0_i32_1 = arith.constant 0 : i32
    return %c0_i32, %c0_i32_0 : i32, i32
  }
  func.func @transform_3(%arg0: i32) -> (i32, i32) {
    %c0_i32 = arith.constant 0 : i32
    %c0_i32_0 = arith.constant 0 : i32
    %c0_i32_1 = arith.constant 0 : i32
    return %c0_i32, %c0_i32_0 : i32, i32
  }
  func.func @transform_4(%arg0: i32) -> (i32, i32) {
    %c0_i32 = arith.constant 0 : i32
    %c0_i32_0 = arith.constant 0 : i32
    %c0_i32_1 = arith.constant 0 : i32
    return %c0_i32, %c0_i32_0 : i32, i32
  }
  func.func @transform_5(%arg0: i32) -> (i32, i32) {
    %c0_i32 = arith.constant 0 : i32
    %c0_i32_0 = arith.constant 0 : i32
    return %arg0, %c0_i32 : i32, i32
  }
}

</mosaic_0001>

<llo_original>
// kernel: tpu_custom_call.1
$region0: #{tpu_custom_call.1}
  #allocation0 [shape = 'u32[]', space=smem, size = 0x4, offset = 0x4, fixed_abs, tag = 'smem constant byte address 0x4 - core index']
  #allocation1 [shape = 'u32[144,128]{1,0:T(1,128)}', space=vmem, size = 0x12000, scoped, tag = 'internal scratch']
  %s0 = inlined_call_operand.hbm [shape: f32[8,384], index: 0, kind: input, shape index: {}]
  %s1 = inlined_call_operand.hbm [shape: f32[384,256], index: 1, kind: input, shape index: {}]
  %s2 = inlined_call_operand.vmem [shape: f32[1,256], index: 2, kind: input, shape index: {}]
  %s3 = inlined_call_operand.hbm [shape: f32[256,128], index: 3, kind: input, shape index: {}]
  %s4 = inlined_call_operand.vmem [shape: f32[1,128], index: 4, kind: input, shape index: {}]
  %s5 = inlined_call_operand.hbm [shape: f32[8,128], index: 5, kind: output, shape index: {}]
  %s6 = sld [smem:[#allocation0]]
  $region42: #{tpu_custom_call.1} parent=0
    _
  %s8 = ssub.s32 1, %s6
  %s9 = scalar_select 0, %s8, %s6
  $region1: #{tpu_custom_call.1} parent=0
    #allocation2 [shape = 'u8[12288]{0}', space=vmem, size = 0x3000, scoped, tag = 'input window, operand 0, single buffered']
    #allocation3 [shape = 's32[1]{0}', space=sflag, size = 0x4, scoped, tag = 'scoped memory for tpu_custom_call.1']
    #allocation4 [shape = 's32[1]{0}', space=sflag, size = 0x4, scoped, tag = 'scoped memory for tpu_custom_call.1']
    #allocation5 [shape = 'u8[393216]{0}', space=vmem, size = 0x60000, scoped, tag = 'input window, operand 1, single buffered']
    #allocation6 [shape = 's32[1]{0}', space=sflag, size = 0x4, scoped, tag = 'scoped memory for tpu_custom_call.1']
    #allocation7 [shape = 'u8[131072]{0}', space=vmem, size = 0x20000, scoped, tag = 'input window, operand 3, single buffered']
    #allocation8 [shape = 'u8[4096]{0}', space=vmem, size = 0x1000, scoped, tag = 'output window, operand 0, single buffered']
    %10 = vsyncpa [#allocation3], 0
    %11 = vsyncpa [#allocation6], 0
    %12 = vsyncpa [#allocation4], 0
    // Predicated region
    $region2: #{tpu_custom_call.1} parent=1 // pred_check
      _
    $region3: #{tpu_custom_call.1} parent=1 // pred_check_branch
      %14 = sbr.rel (0) target = $region5
    $region4: #{tpu_custom_call.1} parent=1 // pred_region
      %s16 = ssub.s32 384, 384
      %17 = vsyncadd [#allocation3], %s16
      %s19 = sshll.u32 [#allocation2], 4
      %s20 = int_to_ptr.vmem [resolvable:$true] %s19
      %22 = dma.hbm_to_vmem [thread:$0]  %s0, 384, %s20, [#allocation3]
    $region5: #{tpu_custom_call.1} parent=1 // pred_fallthru
      _
    // Predicated region
    $region6: #{tpu_custom_call.1} parent=1 // pred_check
      _
    $region7: #{tpu_custom_call.1} parent=1 // pred_check_branch
      %24 = sbr.rel (0) target = $region9
    $region8: #{tpu_custom_call.1} parent=1 // pred_region
      %s26 = ssub.s32 12288, 12288
      %27 = vsyncadd [#allocation6], %s26
      %s28 = sshll.u32 [#allocation5], 4
      %s29 = int_to_ptr.vmem [resolvable:$true] %s28
      %34 = dma.hbm_to_vmem [thread:$0]  %s1, 12288, %s29, [#allocation6], 256, 256, 16
    $region9: #{tpu_custom_call.1} parent=1 // pred_fallthru
      _
    // Predicated region
    $region10: #{tpu_custom_call.1} parent=1 // pred_check
      _
    $region11: #{tpu_custom_call.1} parent=1 // pred_check_branch
      %36 = sbr.rel (0) target = $region13
    $region12: #{tpu_custom_call.1} parent=1 // pred_region
      _
    $region13: #{tpu_custom_call.1} parent=1 // pred_fallthru
      _
    // Predicated region
    $region14: #{tpu_custom_call.1} parent=1 // pred_check
      _
    $region15: #{tpu_custom_call.1} parent=1 // pred_check_branch
      %38 = sbr.rel (0) target = $region17
    $region16: #{tpu_custom_call.1} parent=1 // pred_region
      %s40 = ssub.s32 4096, 4096
      %41 = vsyncadd [#allocation6], %s40
      %s42 = sshll.u32 [#allocation7], 4
      %s43 = int_to_ptr.vmem [resolvable:$true] %s42
      %48 = dma.hbm_to_vmem [thread:$0]  %s3, 4096, %s43, [#allocation6], 128, 128, 8
    $region17: #{tpu_custom_call.1} parent=1 // pred_fallthru
      _
    // Predicated region
    $region18: #{tpu_custom_call.1} parent=1 // pred_check
      _
    $region19: #{tpu_custom_call.1} parent=1 // pred_check_branch
      %50 = sbr.rel (0) target = $region21
    $region20: #{tpu_custom_call.1} parent=1 // pred_region
      _
    $region21: #{tpu_custom_call.1} parent=1 // pred_fallthru
      _
    // Predicated region
    $region22: #{tpu_custom_call.1} parent=1 // pred_check
      _
    $region23: #{tpu_custom_call.1} parent=1 // pred_check_branch
      %52 = sbr.rel (0) target = $region25
    $region24: #{tpu_custom_call.1} parent=1 // pred_region
      %53 = dma.done [#allocation3], 384
    $region25: #{tpu_custom_call.1} parent=1 // pred_fallthru
      _
    // Predicated region
    $region26: #{tpu_custom_call.1} parent=1 // pred_check
      _
    $region27: #{tpu_custom_call.1} parent=1 // pred_check_branch
      %55 = sbr.rel (0) target = $region29
    $region28: #{tpu_custom_call.1} parent=1 // pred_region
      %56 = dma.done [#allocation6], 12288
    $region29: #{tpu_custom_call.1} parent=1 // pred_fallthru
      _
    // Predicated region
    $region30: #{tpu_custom_call.1} parent=1 // pred_check
      _
    $region31: #{tpu_custom_call.1} parent=1 // pred_check_branch
      %58 = sbr.rel (0) target = $region33
    $region32: #{tpu_custom_call.1} parent=1 // pred_region
      %59 = dma.done [#allocation6], 4096
    $region33: #{tpu_custom_call.1} parent=1 // pred_fallthru
      _
    %v60 = vld [vmem:[#allocation2] sm:$0xff]
    %v61 = vld [vmem:[#allocation2 + $0x8] sm:$0xff]
    %v62 = vld [vmem:[#allocation2 + $0x10] sm:$0xff]
    %v63 = vld [vmem:[#allocation5] sm:$0xff]
    %v64 = vld [vmem:[#allocation5 + $0x8] sm:$0xff]
    %v65 = vld [vmem:[#allocation5 + $0x10] sm:$0xff]
    %v66 = vld [vmem:[#allocation5 + $0x18] sm:$0xff]
    %v67 = vld [vmem:[#allocation5 + $0x20] sm:$0xff]
    %v68 = vld [vmem:[#allocation5 + $0x28] sm:$0xff]
    %v69 = vld [vmem:[#allocation5 + $0x30] sm:$0xff]
    %v70 = vld [vmem:[#allocation5 + $0x38] sm:$0xff]
    %v71 = vld [vmem:[#allocation5 + $0x40] sm:$0xff]
    %v72 = vld [vmem:[#allocation5 + $0x48] sm:$0xff]
    %v73 = vld [vmem:[#allocation5 + $0x50] sm:$0xff]
    %v74 = vld [vmem:[#allocation5 + $0x58] sm:$0xff]
    %v75 = vld [vmem:[#allocation5 + $0x60] sm:$0xff]
    %v76 = vld [vmem:[#allocation5 + $0x68] sm:$0xff]
    %v77 = vld [vmem:[#allocation5 + $0x70] sm:$0xff]
    %v78 = vld [vmem:[#allocation5 + $0x78] sm:$0xff]
    %v79 = vld [vmem:[#allocation5 + $0x80] sm:$0xff]
    %v80 = vld [vmem:[#allocation5 + $0x88] sm:$0xff]
    %v81 = vld [vmem:[#allocation5 + $0x90] sm:$0xff]
    %v82 = vld [vmem:[#allocation5 + $0x98] sm:$0xff]
    %v83 = vld [vmem:[#allocation5 + $0xa0] sm:$0xff]
    %v84 = vld [vmem:[#allocation5 + $0xa8] sm:$0xff]
    %v85 = vld [vmem:[#allocation5 + $0xb0] sm:$0xff]
    %v86 = vld [vmem:[#allocation5 + $0xb8] sm:$0xff]
    %v87 = vld [vmem:[#allocation5 + $0xc0] sm:$0xff]
    %v88 = vld [vmem:[#allocation5 + $0xc8] sm:$0xff]
    %v89 = vld [vmem:[#allocation5 + $0xd0] sm:$0xff]
    %v90 = vld [vmem:[#allocation5 + $0xd8] sm:$0xff]
    %v91 = vld [vmem:[#allocation5 + $0xe0] sm:$0xff]
    %v92 = vld [vmem:[#allocation5 + $0xe8] sm:$0xff]
    %v93 = vld [vmem:[#allocation5 + $0xf0] sm:$0xff]
    %v94 = vld [vmem:[#allocation5 + $0xf8] sm:$0xff]
    %v95 = vld [vmem:[#allocation5 + $0x100] sm:$0xff]
    %v96 = vld [vmem:[#allocation5 + $0x108] sm:$0xff]
    %v97 = vld [vmem:[#allocation5 + $0x110] sm:$0xff]
    %v98 = vld [vmem:[#allocation5 + $0x118] sm:$0xff]
    %v99 = vld [vmem:[#allocation5 + $0x120] sm:$0xff]
    %v100 = vld [vmem:[#allocation5 + $0x128] sm:$0xff]
    %v101 = vld [vmem:[#allocation5 + $0x130] sm:$0xff]
    %v102 = vld [vmem:[#allocation5 + $0x138] sm:$0xff]
    %v103 = vld [vmem:[#allocation5 + $0x140] sm:$0xff]
    %v104 = vld [vmem:[#allocation5 + $0x148] sm:$0xff]
    %v105 = vld [vmem:[#allocation5 + $0x150] sm:$0xff]
    %v106 = vld [vmem:[#allocation5 + $0x158] sm:$0xff]
    %v107 = vld [vmem:[#allocation5 + $0x160] sm:$0xff]
    %v108 = vld [vmem:[#allocation5 + $0x168] sm:$0xff]
    %v109 = vld [vmem:[#allocation5 + $0x170] sm:$0xff]
    %v110 = vld [vmem:[#allocation5 + $0x178] sm:$0xff]
    %v111 = vld [vmem:[#allocation5 + $0x180] sm:$0xff]
    %v112 = vld [vmem:[#allocation5 + $0x188] sm:$0xff]
    %v113 = vld [vmem:[#allocation5 + $0x190] sm:$0xff]
    %v114 = vld [vmem:[#allocation5 + $0x198] sm:$0xff]
    %v115 = vld [vmem:[#allocation5 + $0x1a0] sm:$0xff]
    %v116 = vld [vmem:[#allocation5 + $0x1a8] sm:$0xff]
    %v117 = vld [vmem:[#allocation5 + $0x1b0] sm:$0xff]
    %v118 = vld [vmem:[#allocation5 + $0x1b8] sm:$0xff]
    %v119 = vld [vmem:[#allocation5 + $0x1c0] sm:$0xff]
    %v120 = vld [vmem:[#allocation5 + $0x1c8] sm:$0xff]
    %v121 = vld [vmem:[#allocation5 + $0x1d0] sm:$0xff]
    %v122 = vld [vmem:[#allocation5 + $0x1d8] sm:$0xff]
    %v123 = vld [vmem:[#allocation5 + $0x1e0] sm:$0xff]
    %v124 = vld [vmem:[#allocation5 + $0x1e8] sm:$0xff]
    %v125 = vld [vmem:[#allocation5 + $0x1f0] sm:$0xff]
    %v126 = vld [vmem:[#allocation5 + $0x1f8] sm:$0xff]
    %v127 = vld [vmem:[#allocation5 + $0x200] sm:$0xff]
    %v128 = vld [vmem:[#allocation5 + $0x208] sm:$0xff]
    %v129 = vld [vmem:[#allocation5 + $0x210] sm:$0xff]
    %v130 = vld [vmem:[#allocation5 + $0x218] sm:$0xff]
    %v131 = vld [vmem:[#allocation5 + $0x220] sm:$0xff]
    %v132 = vld [vmem:[#allocation5 + $0x228] sm:$0xff]
    %v133 = vld [vmem:[#allocation5 + $0x230] sm:$0xff]
    %v134 = vld [vmem:[#allocation5 + $0x238] sm:$0xff]
    %v135 = vld [vmem:[#allocation5 + $0x240] sm:$0xff]
    %v136 = vld [vmem:[#allocation5 + $0x248] sm:$0xff]
    %v137 = vld [vmem:[#allocation5 + $0x250] sm:$0xff]
    %v138 = vld [vmem:[#allocation5 + $0x258] sm:$0xff]
    %v139 = vld [vmem:[#allocation5 + $0x260] sm:$0xff]
    %v140 = vld [vmem:[#allocation5 + $0x268] sm:$0xff]
    %v141 = vld [vmem:[#allocation5 + $0x270] sm:$0xff]
    %v142 = vld [vmem:[#allocation5 + $0x278] sm:$0xff]
    %v143 = vld [vmem:[#allocation5 + $0x280] sm:$0xff]
    %v144 = vld [vmem:[#allocation5 + $0x288] sm:$0xff]
    %v145 = vld [vmem:[#allocation5 + $0x290] sm:$0xff]
    %v146 = vld [vmem:[#allocation5 + $0x298] sm:$0xff]
    %v147 = vld [vmem:[#allocation5 + $0x2a0] sm:$0xff]
    %v148 = vld [vmem:[#allocation5 + $0x2a8] sm:$0xff]
    %v149 = vld [vmem:[#allocation5 + $0x2b0] sm:$0xff]
    %v150 = vld [vmem:[#allocation5 + $0x2b8] sm:$0xff]
    %v151 = vld [vmem:[#allocation5 + $0x2c0] sm:$0xff]
    %v152 = vld [vmem:[#allocation5 + $0x2c8] sm:$0xff]
    %v153 = vld [vmem:[#allocation5 + $0x2d0] sm:$0xff]
    %v154 = vld [vmem:[#allocation5 + $0x2d8] sm:$0xff]
    %v155 = vld [vmem:[#allocation5 + $0x2e0] sm:$0xff]
    %v156 = vld [vmem:[#allocation5 + $0x2e8] sm:$0xff]
    %v157 = vld [vmem:[#allocation5 + $0x2f0] sm:$0xff]
    %v158 = vld [vmem:[#allocation5 + $0x2f8] sm:$0xff]
    %v159 = vld [vmem:[%s2] sm:$0x3]
    %v161 = vlaneseq
    %v162 = vshrl.u32 %v161, 7
    %v163 = vsub.s32 0, %v162
    %v164 = vrot.slane %v159, %v163
    %v165 = vlaneseq
    %v166 = vshrl.u32 %v165, 7
    %v167 = vsub.s32 1, %v166
    %v168 = vrot.slane %v159, %v167
    %171 = vmatprep.subr.mxu0 %v64
    %172 = vmatpush1.msra.mxu0 %v63
    %173 = vmatprep.subr.mxu0 %v66
    %174 = vmatpush1.msra.mxu0 %v65
    %175 = vmatprep.subr.mxu0 %v68
    %176 = vmatpush1.msra.mxu0 %v67
    %177 = vmatprep.subr.mxu0 %v70
    %178 = vmatpush1.msra.mxu0 %v69
    %179 = vmatprep.subr.mxu0 %v72
    %180 = vmatpush1.msra.mxu0 %v71
    %181 = vmatprep.subr.mxu0 %v74
    %182 = vmatpush1.msra.mxu0 %v73
    %183 = vmatprep.subr.mxu0 %v76
    %184 = vmatpush1.msra.mxu0 %v75
    %185 = vmatprep.subr.mxu0 %v78
    %186 = vmatpush1.msra.mxu0 %v77
    %187 = vmatprep.subr.mxu0 %v80
    %188 = vmatpush1.msra.mxu0 %v79
    %189 = vmatprep.subr.mxu0 %v82
    %190 = vmatpush1.msra.mxu0 %v81
    %191 = vmatprep.subr.mxu0 %v84
    %192 = vmatpush1.msra.mxu0 %v83
    %193 = vmatprep.subr.mxu0 %v86
    %194 = vmatpush1.msra.mxu0 %v85
    %195 = vmatprep.subr.mxu0 %v88
    %196 = vmatpush1.msra.mxu0 %v87
    %197 = vmatprep.subr.mxu0 %v90
    %198 = vmatpush1.msra.mxu0 %v89
    %199 = vmatprep.subr.mxu0 %v92
    %200 = vmatpush1.msra.mxu0 %v91
    %201 = vmatprep.subr.mxu0 %v94
    %202 = vmatpush1.msra.mxu0 %v93
    %203 = vmatprep.subr.mxu0 %v96
    %204 = vmatpush1.msra.mxu0 %v95
    %205 = vmatprep.subr.mxu0 %v98
    %206 = vmatpush1.msra.mxu0 %v97
    %207 = vmatprep.subr.mxu0 %v100
    %208 = vmatpush1.msra.mxu0 %v99
    %209 = vmatprep.subr.mxu0 %v102
    %210 = vmatpush1.msra.mxu0 %v101
    %211 = vmatprep.subr.mxu0 %v104
    %212 = vmatpush1.msra.mxu0 %v103
    %213 = vmatprep.subr.mxu0 %v106
    %214 = vmatpush1.msra.mxu0 %v105
    %215 = vmatprep.subr.mxu0 %v108
    %216 = vmatpush1.msra.mxu0 %v107
    %217 = vmatprep.subr.mxu0 %v110
    %218 = vmatpush1.msra.mxu0 %v109
    %219 = vmatprep.subr.mxu0 %v112
    %220 = vmatpush1.msra.mxu0 %v111
    %221 = vmatprep.subr.mxu0 %v114
    %222 = vmatpush1.msra.mxu0 %v113
    %223 = vmatprep.subr.mxu0 %v116
    %224 = vmatpush1.msra.mxu0 %v115
    %225 = vmatprep.subr.mxu0 %v118
    %226 = vmatpush1.msra.mxu0 %v117
    %227 = vmatprep.subr.mxu0 %v120
    %228 = vmatpush1.msra.mxu0 %v119
    %229 = vmatprep.subr.mxu0 %v122
    %230 = vmatpush1.msra.mxu0 %v121
    %231 = vmatprep.subr.mxu0 %v124
    %232 = vmatpush1.msra.mxu0 %v123
    %233 = vmatprep.subr.mxu0 %v126
    %234 = vmatpush1.msra.mxu0 %v125
    %235 = vmatprep.mubr.f32.mxu0 %v61
    %236 = vmatmul.mubr.f32.gmra.mrb[0].mxu0 %v60
    %v237 = vpop.f32.mrb[0].mxu0
    %v238 = vadd.f32 %v164, %v237
    %v239 = vpop.f32.mrb[0].mxu0
    %v240 = vadd.f32 %v168, %v239
    %241 = vdwg.mxu0
    %242 = vmatprep.subr.mxu0 %v128
    %243 = vmatpush1.msra.mxu0 %v127
    %244 = vmatprep.subr.mxu0 %v130
    %245 = vmatpush1.msra.mxu0 %v129
    %246 = vmatprep.subr.mxu0 %v132
    %247 = vmatpush1.msra.mxu0 %v131
    %248 = vmatprep.subr.mxu0 %v134
    %249 = vmatpush1.msra.mxu0 %v133
    %250 = vmatprep.subr.mxu0 %v136
    %251 = vmatpush1.msra.mxu0 %v135
    %252 = vmatprep.subr.mxu0 %v138
    %253 = vmatpush1.msra.mxu0 %v137
    %254 = vmatprep.subr.mxu0 %v140
    %255 = vmatpush1.msra.mxu0 %v139
    %256 = vmatprep.subr.mxu0 %v142
    %257 = vmatpush1.msra.mxu0 %v141
    %258 = vmatprep.subr.mxu0 %v144
    %259 = vmatpush1.msra.mxu0 %v143
    %260 = vmatprep.subr.mxu0 %v146
    %261 = vmatpush1.msra.mxu0 %v145
    %262 = vmatprep.subr.mxu0 %v148
    %263 = vmatpush1.msra.mxu0 %v147
    %264 = vmatprep.subr.mxu0 %v150
    %265 = vmatpush1.msra.mxu0 %v149
    %266 = vmatprep.subr.mxu0 %v152
    %267 = vmatpush1.msra.mxu0 %v151
    %268 = vmatprep.subr.mxu0 %v154
    %269 = vmatpush1.msra.mxu0 %v153
    %270 = vmatprep.subr.mxu0 %v156
    %271 = vmatpush1.msra.mxu0 %v155
    %272 = vmatprep.subr.mxu0 %v158
    %273 = vmatpush1.msra.mxu0 %v157
    %274 = vmatprep.subr.mxu0 0.0
    %275 = vmatpush1.msra.mxu0 0.0
    %276 = vmatprep.subr.mxu0 0.0
    %277 = vmatpush1.msra.mxu0 0.0
    %278 = vmatprep.subr.mxu0 0.0
    %279 = vmatpush1.msra.mxu0 0.0
    %280 = vmatprep.subr.mxu0 0.0
    %281 = vmatpush1.msra.mxu0 0.0
    %282 = vmatprep.subr.mxu0 0.0
    %283 = vmatpush1.msra.mxu0 0.0
    %284 = vmatprep.subr.mxu0 0.0
    %285 = vmatpush1.msra.mxu0 0.0
    %286 = vmatprep.subr.mxu0 0.0
    %287 = vmatpush1.msra.mxu0 0.0
    %288 = vmatprep.subr.mxu0 0.0
    %289 = vmatpush1.msra.mxu0 0.0
    %290 = vmatprep.subr.mxu0 0.0
    %291 = vmatpush1.msra.mxu0 0.0
    %292 = vmatprep.subr.mxu0 0.0
    %293 = vmatpush1.msra.mxu0 0.0
    %294 = vmatprep.subr.mxu0 0.0
    %295 = vmatpush1.msra.mxu0 0.0
    %296 = vmatprep.subr.mxu0 0.0
    %297 = vmatpush1.msra.mxu0 0.0
    %298 = vmatprep.subr.mxu0 0.0
    %299 = vmatpush1.msra.mxu0 0.0
    %300 = vmatprep.subr.mxu0 0.0
    %301 = vmatpush1.msra.mxu0 0.0
    %302 = vmatprep.subr.mxu0 0.0
    %303 = vmatpush1.msra.mxu0 0.0
    %304 = vmatprep.subr.mxu0 0.0
    %305 = vmatpush1.msra.mxu0 0.0
    %306 = vmatprep.mubr.f32.mxu0 0.0
    %307 = vmatmul.mubr.f32.gmra.mrb[0].mxu0 %v62
    %v308 = vpop.f32.mrb[0].mxu0
    %v309 = vadd.f32 %v238, %v308
    %v310 = vpop.f32.mrb[0].mxu0
    %v311 = vadd.f32 %v240, %v310
    %312 = vdwg.mxu0
    %v313 = vmax.f32 %v309, 0.0
    %v314 = vmax.f32 %v311, 0.0
    %v315 = vld [vmem:[#allocation7] sm:$0xff]
    %v316 = vld [vmem:[#allocation7 + $0x8] sm:$0xff]
    %v317 = vld [vmem:[#allocation7 + $0x10] sm:$0xff]
    %v318 = vld [vmem:[#allocation7 + $0x18] sm:$0xff]
    %v319 = vld [vmem:[#allocation7 + $0x20] sm:$0xff]
    %v320 = vld [vmem:[#allocation7 + $0x28] sm:$0xff]
    %v321 = vld [vmem:[#allocation7 + $0x30] sm:$0xff]
    %v322 = vld [vmem:[#allocation7 + $0x38] sm:$0xff]
    %v323 = vld [vmem:[#allocation7 + $0x40] sm:$0xff]
    %v324 = vld [vmem:[#allocation7 + $0x48] sm:$0xff]
    %v325 = vld [vmem:[#allocation7 + $0x50] sm:$0xff]
    %v326 = vld [vmem:[#allocation7 + $0x58] sm:$0xff]
    %v327 = vld [vmem:[#allocation7 + $0x60] sm:$0xff]
    %v328 = vld [vmem:[#allocation7 + $0x68] sm:$0xff]
    %v329 = vld [vmem:[#allocation7 + $0x70] sm:$0xff]
    %v330 = vld [vmem:[#allocation7 + $0x78] sm:$0xff]
    %v331 = vld [vmem:[#allocation7 + $0x80] sm:$0xff]
    %v332 = vld [vmem:[#allocation7 + $0x88] sm:$0xff]
    %v333 = vld [vmem:[#allocation7 + $0x90] sm:$0xff]
    %v334 = vld [vmem:[#allocation7 + $0x98] sm:$0xff]
    %v335 = vld [vmem:[#allocation7 + $0xa0] sm:$0xff]
    %v336 = vld [vmem:[#allocation7 + $0xa8] sm:$0xff]
    %v337 = vld [vmem:[#allocation7 + $0xb0] sm:$0xff]
    %v338 = vld [vmem:[#allocation7 + $0xb8] sm:$0xff]
    %v339 = vld [vmem:[#allocation7 + $0xc0] sm:$0xff]
    %v340 = vld [vmem:[#allocation7 + $0xc8] sm:$0xff]
    %v341 = vld [vmem:[#allocation7 + $0xd0] sm:$0xff]
    %v342 = vld [vmem:[#allocation7 + $0xd8] sm:$0xff]
    %v343 = vld [vmem:[#allocation7 + $0xe0] sm:$0xff]
    %v344 = vld [vmem:[#allocation7 + $0xe8] sm:$0xff]
    %v345 = vld [vmem:[#allocation7 + $0xf0] sm:$0xff]
    %v346 = vld [vmem:[#allocation7 + $0xf8] sm:$0xff]
    %v347 = vld [vmem:[%s4] sm:$0x1]
    %v349 = vlaneseq
    %v350 = vshrl.u32 %v349, 7
    %v351 = vsub.s32 0, %v350
    %v352 = vrot.slane %v347, %v351
    %354 = vmatprep.subr.mxu0 0.0
    %355 = vmatpush1.msra.mxu0 %v315
    %356 = vmatprep.subr.mxu0 0.0
    %357 = vmatpush1.msra.mxu0 %v316
    %358 = vmatprep.subr.mxu0 0.0
    %359 = vmatpush1.msra.mxu0 %v317
    %360 = vmatprep.subr.mxu0 0.0
    %361 = vmatpush1.msra.mxu0 %v318
    %362 = vmatprep.subr.mxu0 0.0
    %363 = vmatpush1.msra.mxu0 %v319
    %364 = vmatprep.subr.mxu0 0.0
    %365 = vmatpush1.msra.mxu0 %v320
    %366 = vmatprep.subr.mxu0 0.0
    %367 = vmatpush1.msra.mxu0 %v321
    %368 = vmatprep.subr.mxu0 0.0
    %369 = vmatpush1.msra.mxu0 %v322
    %370 = vmatprep.subr.mxu0 0.0
    %371 = vmatpush1.msra.mxu0 %v323
    %372 = vmatprep.subr.mxu0 0.0
    %373 = vmatpush1.msra.mxu0 %v324
    %374 = vmatprep.subr.mxu0 0.0
    %375 = vmatpush1.msra.mxu0 %v325
    %376 = vmatprep.subr.mxu0 0.0
    %377 = vmatpush1.msra.mxu0 %v326
    %378 = vmatprep.subr.mxu0 0.0
    %379 = vmatpush1.msra.mxu0 %v327
    %380 = vmatprep.subr.mxu0 0.0
    %381 = vmatpush1.msra.mxu0 %v328
    %382 = vmatprep.subr.mxu0 0.0
    %383 = vmatpush1.msra.mxu0 %v329
    %384 = vmatprep.subr.mxu0 0.0
    %385 = vmatpush1.msra.mxu0 %v330
    %386 = vmatprep.subr.mxu0 0.0
    %387 = vmatpush1.msra.mxu0 %v331
    %388 = vmatprep.subr.mxu0 0.0
    %389 = vmatpush1.msra.mxu0 %v332
    %390 = vmatprep.subr.mxu0 0.0
    %391 = vmatpush1.msra.mxu0 %v333
    %392 = vmatprep.subr.mxu0 0.0
    %393 = vmatpush1.msra.mxu0 %v334
    %394 = vmatprep.subr.mxu0 0.0
    %395 = vmatpush1.msra.mxu0 %v335
    %396 = vmatprep.subr.mxu0 0.0
    %397 = vmatpush1.msra.mxu0 %v336
    %398 = vmatprep.subr.mxu0 0.0
    %399 = vmatpush1.msra.mxu0 %v337
    %400 = vmatprep.subr.mxu0 0.0
    %401 = vmatpush1.msra.mxu0 %v338
    %402 = vmatprep.subr.mxu0 0.0
    %403 = vmatpush1.msra.mxu0 %v339
    %404 = vmatprep.subr.mxu0 0.0
    %405 = vmatpush1.msra.mxu0 %v340
    %406 = vmatprep.subr.mxu0 0.0
    %407 = vmatpush1.msra.mxu0 %v341
    %408 = vmatprep.subr.mxu0 0.0
    %409 = vmatpush1.msra.mxu0 %v342
    %410 = vmatprep.subr.mxu0 0.0
    %411 = vmatpush1.msra.mxu0 %v343
    %412 = vmatprep.subr.mxu0 0.0
    %413 = vmatpush1.msra.mxu0 %v344
    %414 = vmatprep.subr.mxu0 0.0
    %415 = vmatpush1.msra.mxu0 %v345
    %416 = vmatprep.subr.mxu0 0.0
    %417 = vmatpush1.msra.mxu0 %v346
    %418 = vmatprep.mubr.f32.mxu0 %v314
    %419 = vmatmul.mubr.f32.gmra.mrb[0].mxu0 %v313
    %v420 = vpop.f32.mrb[0].mxu0
    %v421 = vadd.f32 %v352, %v420
    %v422 = vpop.f32.mrb[0].mxu0
    %423 = vdwg.mxu0
    %424 = vst [vmem:[#allocation8] sm:$0xff] %v421
    // Predicated region
    $region34: #{tpu_custom_call.1} parent=1 // pred_check
      _
    $region35: #{tpu_custom_call.1} parent=1 // pred_check_branch
      %426 = sbr.rel (0) target = $region37
    $region36: #{tpu_custom_call.1} parent=1 // pred_region
      %s428 = ssub.s32 128, 128
      %429 = vsyncadd [#allocation4], %s428
      %s431 = sshll.u32 [#allocation8], 4
      %s432 = int_to_ptr.vmem [resolvable:$true] %s431
      %434 = dma.vmem_to_hbm [thread:$0]  %s432, 128, %s5, [#allocation4]
    $region37: #{tpu_custom_call.1} parent=1 // pred_fallthru
      _
    // Predicated region
    $region38: #{tpu_custom_call.1} parent=1 // pred_check
      _
    $region39: #{tpu_custom_call.1} parent=1 // pred_check_branch
      %436 = sbr.rel (0) target = $region41
    $region40: #{tpu_custom_call.1} parent=1 // pred_region
      %437 = dma.done [#allocation4], 128
    $region41: #{tpu_custom_call.1} parent=1 // pred_fallthru
      _
    %438 = vsyncpa [#allocation3], 1
    %439 = vsyncpa [#allocation6], 1
    %440 = vsyncpa [#allocation4], 1

</llo_original>
